<compile_context>
chip_gen: v7x
topology: tpu7x:2x2x1
jax: 0.10.0
libtpu: 0.0.40
codegen_flags: <defaults>
</compile_context>

<pallas_src>
import jax
import jax.numpy as jnp
from jax import lax
from jax.experimental import pallas as pl
from jax.experimental.pallas import tpu as pltpu


def _gather_kernel(ids_ref, w_hbm, o_ref, buf, sem):
    # ids_ref: (n_pad,) int32 in SMEM (scalar-prefetched token ids)
    # w_hbm:   (V, D) embedding table, left in HBM (memory_space=pl.ANY)
    # o_ref:   (G, D) output tile in VMEM
    # buf:     (2, G, D) VMEM double buffer for gathered rows
    # sem:     (2, G) DMA semaphores
    i = pl.program_id(0)
    n = pl.num_programs(0)
    g_rows = o_ref.shape[0]

    def start_fetch(block_idx, slot):
        base = block_idx * g_rows
        for g in range(g_rows):                      # static unroll, G concurrent DMAs
            row = ids_ref[base + g]                  # SMEM scalar read
            pltpu.make_async_copy(
                w_hbm.at[row], buf.at[slot, g], sem.at[slot, g]
            ).start()

    # Prime the pipeline: fetch block 0 into slot 0 on the first step.
    @pl.when(i == 0)
    def _():
        start_fetch(0, 0)

    slot = lax.rem(i, 2)

    # Prefetch next block's rows into the other slot while we consume this one.
    @pl.when(i + 1 < n)
    def _():
        start_fetch(i + 1, 1 - slot)

    # Wait for this block's G row DMAs to land.
    for g in range(g_rows):
        pltpu.make_async_copy(
            w_hbm.at[0], buf.at[slot, g], sem.at[slot, g]
        ).wait()

    # Single lane-dense (G, D) store.
    o_ref[...] = buf[slot]


def embedding_lookup(token_ids: jax.Array, weight: jax.Array, *, row_block: int = 8):
    """Pallas equivalent of `weight[token_ids]` (PyTorch Embedding.forward)."""
    V, D = weight.shape
    assert D % 128 == 0, "embedding_dim should be a multiple of 128 for lane alignment"

    lead_shape = token_ids.shape
    ids_flat = token_ids.reshape(-1).astype(jnp.int32)
    N = int(ids_flat.shape[0])

    # Rows gathered per grid step: multiple of 8 (sublane alignment).
    g = max(8, (int(row_block) // 8) * 8)
    n_pad = ((N + g - 1) // g) * g
    n_blocks = n_pad // g

    # Clamp ids so the HBM row DMA is always in bounds (PyTorch would raise).
    ids_flat = jnp.clip(ids_flat, 0, V - 1)
    if n_pad == N:
        ids_padded = ids_flat
    else:
        ids_padded = jnp.concatenate(
            [ids_flat, jnp.zeros((n_pad - N,), jnp.int32)]
        )

    # VMEM need: (2,G,D) gather scratch + double-buffered (G,D) output tiles.
    itemsize = jnp.dtype(weight.dtype).itemsize
    need = 2 * g * D * itemsize + 2 * g * D * itemsize
    # Clamp to 48 MiB: safe on v7x (64 MiB/TC) and v5e/v6e (128 MiB).
    vmem_limit = int(min(48 * 1024 * 1024, max(16 * 1024 * 1024, 4 * need)))

    grid_spec = pltpu.PrefetchScalarGridSpec(
        num_scalar_prefetch=1,                        # ids -> SMEM
        grid=(n_blocks,),
        in_specs=[
            pl.BlockSpec(memory_space=pl.ANY),        # table stays in HBM
        ],
        out_specs=pl.BlockSpec((g, D), lambda i, ids: (i, 0)),
        scratch_shapes=[
            pltpu.VMEM((2, g, D), weight.dtype),      # double-buffered gathered rows
            pltpu.SemaphoreType.DMA((2, g)),          # one sem per (slot, row)
        ],
    )

    out_flat = pl.pallas_call(
        _gather_kernel,
        out_shape=jax.ShapeDtypeStruct((n_pad, D), weight.dtype),
        grid_spec=grid_spec,
        compiler_params=pltpu.CompilerParams(
            # Manual double-buffer prefetch chain is order dependent.
            dimension_semantics=("arbitrary",),
            vmem_limit_bytes=vmem_limit,
        ),
    )(ids_padded, weight)

    if n_pad != N:
        out_flat = out_flat[:N]
    return out_flat.reshape(*lead_shape, D)


if __name__ == "__main__":
    key = jax.random.PRNGKey(0)
    k_w, k_ids = jax.random.split(key)

    num_embeddings = 32
    embedding_dim = 128
    B, S = 2, 8

    # Deterministic init matching nn.init.trunc_normal_(mean=0, std=1, a=-3, b=3)
    weight = jax.random.truncated_normal(
        k_w, lower=-3.0, upper=3.0, shape=(num_embeddings, embedding_dim),
        dtype=jnp.float32,
    )

    token_ids = jax.random.randint(
        k_ids, (B, S), minval=0, maxval=num_embeddings, dtype=jnp.int32
    )

    out = embedding_lookup(token_ids, weight)
    out = jax.block_until_ready(out)

    # Reference check: the DMA gather is an exact copy of the selected rows.
    ref = weight[token_ids]
    assert out.shape == (B, S, embedding_dim)
    assert out.dtype == weight.dtype
    assert jnp.array_equal(out, ref), "Pallas embedding lookup mismatch"

    print("KERNEL_OK")
</pallas_src>

<mosaic_0001>
module attributes {stable_mosaic.version = 11 : i64} {
  func.func @_gather_kernel(%arg0: i32, %arg1: memref<16xi32, #tpu.memory_space<smem>>, %arg2: memref<32x128xf32, #tpu.memory_space<any>>, %arg3: memref<8x128xf32, #tpu.memory_space<vmem>>, %arg4: memref<2x8x128xf32, #tpu.memory_space<vmem>>, %arg5: memref<2x8x!tpu.dma_semaphore, #tpu.memory_space<semaphore_mem>>) attributes {dimension_semantics = [#tpu.dimension_semantics<arbitrary>], iteration_bounds = array<i64: 2>, scalar_prefetch = 1 : i64, scratch_operands = 2 : i64, tpu.core_type = #tpu.core_type<tc>, window_params = [{}, {transform_indices = @transform_1, window_bounds = array<i64: 8, 128>}]} {
    %c0_i32 = arith.constant 0 : i32
    %0 = arith.cmpi eq, %arg0, %c0_i32 : i32
    %1 = arith.extui %0 : i1 to i32
    %c0_i32_0 = arith.constant 0 : i32
    %2 = arith.cmpi ne, %1, %c0_i32_0 : i32
    scf.if %2 {
      %c0_41 = arith.constant 0 : index
      %60 = memref.load %arg1[%c0_41] : memref<16xi32, #tpu.memory_space<smem>>
      %c0_i32_42 = arith.constant 0 : i32
      %c0_i32_43 = arith.constant 0 : i32
      %c0_i32_44 = arith.constant 0 : i32
      %c0_i32_45 = arith.constant 0 : i32
      %c0_i32_46 = arith.constant 0 : i32
      %61 = tpu.memref_slice %arg2[%60, %c0_i32_46] : memref<32x128xf32, #tpu.memory_space<any>> -> memref<1x128xf32, #tpu.memory_space<any>>
      %62 = tpu.memref_squeeze %61 : memref<1x128xf32, #tpu.memory_space<any>> -> memref<128xf32, #tpu.memory_space<any>>
      %c0_i32_47 = arith.constant 0 : i32
      %63 = tpu.memref_slice %arg4[%c0_i32_42, %c0_i32_43, %c0_i32_47] : memref<2x8x128xf32, #tpu.memory_space<vmem>> -> memref<1x1x128xf32, #tpu.memory_space<vmem>>
      %64 = tpu.memref_squeeze %63 : memref<1x1x128xf32, #tpu.memory_space<vmem>> -> memref<128xf32, #tpu.memory_space<vmem>>
      %65 = tpu.memref_slice %arg5[%c0_i32_44, %c0_i32_45] : memref<2x8x!tpu.dma_semaphore, #tpu.memory_space<semaphore_mem>> -> memref<1x1x!tpu.dma_semaphore, #tpu.memory_space<semaphore_mem>>
      %66 = tpu.memref_squeeze %65 : memref<1x1x!tpu.dma_semaphore, #tpu.memory_space<semaphore_mem>> -> memref<!tpu.dma_semaphore, #tpu.memory_space<semaphore_mem>>
      tpu.enqueue_dma source(%62 : memref<128xf32, #tpu.memory_space<any>>) target(%64 : memref<128xf32, #tpu.memory_space<vmem>>) target_semaphore(%66 : memref<!tpu.dma_semaphore, #tpu.memory_space<semaphore_mem>>)
      %c1 = arith.constant 1 : index
      %67 = memref.load %arg1[%c1] : memref<16xi32, #tpu.memory_space<smem>>
      %c0_i32_48 = arith.constant 0 : i32
      %c1_i32_49 = arith.constant 1 : i32
      %c0_i32_50 = arith.constant 0 : i32
      %c1_i32_51 = arith.constant 1 : i32
      %c0_i32_52 = arith.constant 0 : i32
      %68 = tpu.memref_slice %arg2[%67, %c0_i32_52] : memref<32x128xf32, #tpu.memory_space<any>> -> memref<1x128xf32, #tpu.memory_space<any>>
      %69 = tpu.memref_squeeze %68 : memref<1x128xf32, #tpu.memory_space<any>> -> memref<128xf32, #tpu.memory_space<any>>
      %c0_i32_53 = arith.constant 0 : i32
      %70 = tpu.memref_slice %arg4[%c0_i32_48, %c1_i32_49, %c0_i32_53] : memref<2x8x128xf32, #tpu.memory_space<vmem>> -> memref<1x1x128xf32, #tpu.memory_space<vmem>>
      %71 = tpu.memref_squeeze %70 : memref<1x1x128xf32, #tpu.memory_space<vmem>> -> memref<128xf32, #tpu.memory_space<vmem>>
      %72 = tpu.memref_slice %arg5[%c0_i32_50, %c1_i32_51] : memref<2x8x!tpu.dma_semaphore, #tpu.memory_space<semaphore_mem>> -> memref<1x1x!tpu.dma_semaphore, #tpu.memory_space<semaphore_mem>>
      %73 = tpu.memref_squeeze %72 : memref<1x1x!tpu.dma_semaphore, #tpu.memory_space<semaphore_mem>> -> memref<!tpu.dma_semaphore, #tpu.memory_space<semaphore_mem>>
      tpu.enqueue_dma source(%69 : memref<128xf32, #tpu.memory_space<any>>) target(%71 : memref<128xf32, #tpu.memory_space<vmem>>) target_semaphore(%73 : memref<!tpu.dma_semaphore, #tpu.memory_space<semaphore_mem>>)
      %c2 = arith.constant 2 : index
      %74 = memref.load %arg1[%c2] : memref<16xi32, #tpu.memory_space<smem>>
      %c0_i32_54 = arith.constant 0 : i32
      %c2_i32_55 = arith.constant 2 : i32
      %c0_i32_56 = arith.constant 0 : i32
      %c2_i32_57 = arith.constant 2 : i32
      %c0_i32_58 = arith.constant 0 : i32
      %75 = tpu.memref_slice %arg2[%74, %c0_i32_58] : memref<32x128xf32, #tpu.memory_space<any>> -> memref<1x128xf32, #tpu.memory_space<any>>
      %76 = tpu.memref_squeeze %75 : memref<1x128xf32, #tpu.memory_space<any>> -> memref<128xf32, #tpu.memory_space<any>>
      %c0_i32_59 = arith.constant 0 : i32
      %77 = tpu.memref_slice %arg4[%c0_i32_54, %c2_i32_55, %c0_i32_59] : memref<2x8x128xf32, #tpu.memory_space<vmem>> -> memref<1x1x128xf32, #tpu.memory_space<vmem>>
      %78 = tpu.memref_squeeze %77 : memref<1x1x128xf32, #tpu.memory_space<vmem>> -> memref<128xf32, #tpu.memory_space<vmem>>
      %79 = tpu.memref_slice %arg5[%c0_i32_56, %c2_i32_57] : memref<2x8x!tpu.dma_semaphore, #tpu.memory_space<semaphore_mem>> -> memref<1x1x!tpu.dma_semaphore, #tpu.memory_space<semaphore_mem>>
      %80 = tpu.memref_squeeze %79 : memref<1x1x!tpu.dma_semaphore, #tpu.memory_space<semaphore_mem>> -> memref<!tpu.dma_semaphore, #tpu.memory_space<semaphore_mem>>
      tpu.enqueue_dma source(%76 : memref<128xf32, #tpu.memory_space<any>>) target(%78 : memref<128xf32, #tpu.memory_space<vmem>>) target_semaphore(%80 : memref<!tpu.dma_semaphore, #tpu.memory_space<semaphore_mem>>)
      %c3 = arith.constant 3 : index
      %81 = memref.load %arg1[%c3] : memref<16xi32, #tpu.memory_space<smem>>
      %c0_i32_60 = arith.constant 0 : i32
      %c3_i32_61 = arith.constant 3 : i32
      %c0_i32_62 = arith.constant 0 : i32
      %c3_i32_63 = arith.constant 3 : i32
      %c0_i32_64 = arith.constant 0 : i32
      %82 = tpu.memref_slice %arg2[%81, %c0_i32_64] : memref<32x128xf32, #tpu.memory_space<any>> -> memref<1x128xf32, #tpu.memory_space<any>>
      %83 = tpu.memref_squeeze %82 : memref<1x128xf32, #tpu.memory_space<any>> -> memref<128xf32, #tpu.memory_space<any>>
      %c0_i32_65 = arith.constant 0 : i32
      %84 = tpu.memref_slice %arg4[%c0_i32_60, %c3_i32_61, %c0_i32_65] : memref<2x8x128xf32, #tpu.memory_space<vmem>> -> memref<1x1x128xf32, #tpu.memory_space<vmem>>
      %85 = tpu.memref_squeeze %84 : memref<1x1x128xf32, #tpu.memory_space<vmem>> -> memref<128xf32, #tpu.memory_space<vmem>>
      %86 = tpu.memref_slice %arg5[%c0_i32_62, %c3_i32_63] : memref<2x8x!tpu.dma_semaphore, #tpu.memory_space<semaphore_mem>> -> memref<1x1x!tpu.dma_semaphore, #tpu.memory_space<semaphore_mem>>
      %87 = tpu.memref_squeeze %86 : memref<1x1x!tpu.dma_semaphore, #tpu.memory_space<semaphore_mem>> -> memref<!tpu.dma_semaphore, #tpu.memory_space<semaphore_mem>>
      tpu.enqueue_dma source(%83 : memref<128xf32, #tpu.memory_space<any>>) target(%85 : memref<128xf32, #tpu.memory_space<vmem>>) target_semaphore(%87 : memref<!tpu.dma_semaphore, #tpu.memory_space<semaphore_mem>>)
      %c4 = arith.constant 4 : index
      %88 = memref.load %arg1[%c4] : memref<16xi32, #tpu.memory_space<smem>>
      %c0_i32_66 = arith.constant 0 : i32
      %c4_i32_67 = arith.constant 4 : i32
      %c0_i32_68 = arith.constant 0 : i32
      %c4_i32_69 = arith.constant 4 : i32
      %c0_i32_70 = arith.constant 0 : i32
      %89 = tpu.memref_slice %arg2[%88, %c0_i32_70] : memref<32x128xf32, #tpu.memory_space<any>> -> memref<1x128xf32, #tpu.memory_space<any>>
      %90 = tpu.memref_squeeze %89 : memref<1x128xf32, #tpu.memory_space<any>> -> memref<128xf32, #tpu.memory_space<any>>
      %c0_i32_71 = arith.constant 0 : i32
      %91 = tpu.memref_slice %arg4[%c0_i32_66, %c4_i32_67, %c0_i32_71] : memref<2x8x128xf32, #tpu.memory_space<vmem>> -> memref<1x1x128xf32, #tpu.memory_space<vmem>>
      %92 = tpu.memref_squeeze %91 : memref<1x1x128xf32, #tpu.memory_space<vmem>> -> memref<128xf32, #tpu.memory_space<vmem>>
      %93 = tpu.memref_slice %arg5[%c0_i32_68, %c4_i32_69] : memref<2x8x!tpu.dma_semaphore, #tpu.memory_space<semaphore_mem>> -> memref<1x1x!tpu.dma_semaphore, #tpu.memory_space<semaphore_mem>>
      %94 = tpu.memref_squeeze %93 : memref<1x1x!tpu.dma_semaphore, #tpu.memory_space<semaphore_mem>> -> memref<!tpu.dma_semaphore, #tpu.memory_space<semaphore_mem>>
      tpu.enqueue_dma source(%90 : memref<128xf32, #tpu.memory_space<any>>) target(%92 : memref<128xf32, #tpu.memory_space<vmem>>) target_semaphore(%94 : memref<!tpu.dma_semaphore, #tpu.memory_space<semaphore_mem>>)
      %c5 = arith.constant 5 : index
      %95 = memref.load %arg1[%c5] : memref<16xi32, #tpu.memory_space<smem>>
      %c0_i32_72 = arith.constant 0 : i32
      %c5_i32_73 = arith.constant 5 : i32
      %c0_i32_74 = arith.constant 0 : i32
      %c5_i32_75 = arith.constant 5 : i32
      %c0_i32_76 = arith.constant 0 : i32
      %96 = tpu.memref_slice %arg2[%95, %c0_i32_76] : memref<32x128xf32, #tpu.memory_space<any>> -> memref<1x128xf32, #tpu.memory_space<any>>
      %97 = tpu.memref_squeeze %96 : memref<1x128xf32, #tpu.memory_space<any>> -> memref<128xf32, #tpu.memory_space<any>>
      %c0_i32_77 = arith.constant 0 : i32
      %98 = tpu.memref_slice %arg4[%c0_i32_72, %c5_i32_73, %c0_i32_77] : memref<2x8x128xf32, #tpu.memory_space<vmem>> -> memref<1x1x128xf32, #tpu.memory_space<vmem>>
      %99 = tpu.memref_squeeze %98 : memref<1x1x128xf32, #tpu.memory_space<vmem>> -> memref<128xf32, #tpu.memory_space<vmem>>
      %100 = tpu.memref_slice %arg5[%c0_i32_74, %c5_i32_75] : memref<2x8x!tpu.dma_semaphore, #tpu.memory_space<semaphore_mem>> -> memref<1x1x!tpu.dma_semaphore, #tpu.memory_space<semaphore_mem>>
      %101 = tpu.memref_squeeze %100 : memref<1x1x!tpu.dma_semaphore, #tpu.memory_space<semaphore_mem>> -> memref<!tpu.dma_semaphore, #tpu.memory_space<semaphore_mem>>
      tpu.enqueue_dma source(%97 : memref<128xf32, #tpu.memory_space<any>>) target(%99 : memref<128xf32, #tpu.memory_space<vmem>>) target_semaphore(%101 : memref<!tpu.dma_semaphore, #tpu.memory_space<semaphore_mem>>)
      %c6 = arith.constant 6 : index
      %102 = memref.load %arg1[%c6] : memref<16xi32, #tpu.memory_space<smem>>
      %c0_i32_78 = arith.constant 0 : i32
      %c6_i32_79 = arith.constant 6 : i32
      %c0_i32_80 = arith.constant 0 : i32
      %c6_i32_81 = arith.constant 6 : i32
      %c0_i32_82 = arith.constant 0 : i32
      %103 = tpu.memref_slice %arg2[%102, %c0_i32_82] : memref<32x128xf32, #tpu.memory_space<any>> -> memref<1x128xf32, #tpu.memory_space<any>>
      %104 = tpu.memref_squeeze %103 : memref<1x128xf32, #tpu.memory_space<any>> -> memref<128xf32, #tpu.memory_space<any>>
      %c0_i32_83 = arith.constant 0 : i32
      %105 = tpu.memref_slice %arg4[%c0_i32_78, %c6_i32_79, %c0_i32_83] : memref<2x8x128xf32, #tpu.memory_space<vmem>> -> memref<1x1x128xf32, #tpu.memory_space<vmem>>
      %106 = tpu.memref_squeeze %105 : memref<1x1x128xf32, #tpu.memory_space<vmem>> -> memref<128xf32, #tpu.memory_space<vmem>>
      %107 = tpu.memref_slice %arg5[%c0_i32_80, %c6_i32_81] : memref<2x8x!tpu.dma_semaphore, #tpu.memory_space<semaphore_mem>> -> memref<1x1x!tpu.dma_semaphore, #tpu.memory_space<semaphore_mem>>
      %108 = tpu.memref_squeeze %107 : memref<1x1x!tpu.dma_semaphore, #tpu.memory_space<semaphore_mem>> -> memref<!tpu.dma_semaphore, #tpu.memory_space<semaphore_mem>>
      tpu.enqueue_dma source(%104 : memref<128xf32, #tpu.memory_space<any>>) target(%106 : memref<128xf32, #tpu.memory_space<vmem>>) target_semaphore(%108 : memref<!tpu.dma_semaphore, #tpu.memory_space<semaphore_mem>>)
      %c7 = arith.constant 7 : index
      %109 = memref.load %arg1[%c7] : memref<16xi32, #tpu.memory_space<smem>>
      %c0_i32_84 = arith.constant 0 : i32
      %c7_i32_85 = arith.constant 7 : i32
      %c0_i32_86 = arith.constant 0 : i32
      %c7_i32_87 = arith.constant 7 : i32
      %c0_i32_88 = arith.constant 0 : i32
      %110 = tpu.memref_slice %arg2[%109, %c0_i32_88] : memref<32x128xf32, #tpu.memory_space<any>> -> memref<1x128xf32, #tpu.memory_space<any>>
      %111 = tpu.memref_squeeze %110 : memref<1x128xf32, #tpu.memory_space<any>> -> memref<128xf32, #tpu.memory_space<any>>
      %c0_i32_89 = arith.constant 0 : i32
      %112 = tpu.memref_slice %arg4[%c0_i32_84, %c7_i32_85, %c0_i32_89] : memref<2x8x128xf32, #tpu.memory_space<vmem>> -> memref<1x1x128xf32, #tpu.memory_space<vmem>>
      %113 = tpu.memref_squeeze %112 : memref<1x1x128xf32, #tpu.memory_space<vmem>> -> memref<128xf32, #tpu.memory_space<vmem>>
      %114 = tpu.memref_slice %arg5[%c0_i32_86, %c7_i32_87] : memref<2x8x!tpu.dma_semaphore, #tpu.memory_space<semaphore_mem>> -> memref<1x1x!tpu.dma_semaphore, #tpu.memory_space<semaphore_mem>>
      %115 = tpu.memref_squeeze %114 : memref<1x1x!tpu.dma_semaphore, #tpu.memory_space<semaphore_mem>> -> memref<!tpu.dma_semaphore, #tpu.memory_space<semaphore_mem>>
      tpu.enqueue_dma source(%111 : memref<128xf32, #tpu.memory_space<any>>) target(%113 : memref<128xf32, #tpu.memory_space<vmem>>) target_semaphore(%115 : memref<!tpu.dma_semaphore, #tpu.memory_space<semaphore_mem>>)
    } else {
    }
    %c2_i32 = arith.constant 2 : i32
    %3 = arith.remsi %arg0, %c2_i32 : i32
    %c1_i32 = arith.constant 1 : i32
    %4 = arith.addi %arg0, %c1_i32 : i32
    %c2_i32_1 = arith.constant 2 : i32
    %5 = arith.cmpi slt, %4, %c2_i32_1 : i32
    %6 = arith.extui %5 : i1 to i32
    %c0_i32_2 = arith.constant 0 : i32
    %7 = arith.cmpi ne, %6, %c0_i32_2 : i32
    scf.if %7 {
      %c1_i32_41 = arith.constant 1 : i32
      %60 = arith.addi %arg0, %c1_i32_41 : i32
      %c1_i32_42 = arith.constant 1 : i32
      %61 = arith.subi %c1_i32_42, %3 : i32
      %c8_i32 = arith.constant 8 : i32
      %62 = arith.muli %60, %c8_i32 : i32
      %c0_i32_43 = arith.constant 0 : i32
      %63 = arith.addi %62, %c0_i32_43 : i32
      %64 = arith.index_cast %63 : i32 to index
      %65 = memref.load %arg1[%64] : memref<16xi32, #tpu.memory_space<smem>>
      %c0_i32_44 = arith.constant 0 : i32
      %c0_i32_45 = arith.constant 0 : i32
      %c0_i32_46 = arith.constant 0 : i32
      %66 = tpu.memref_slice %arg2[%65, %c0_i32_46] : memref<32x128xf32, #tpu.memory_space<any>> -> memref<1x128xf32, #tpu.memory_space<any>>
      %67 = tpu.memref_squeeze %66 : memref<1x128xf32, #tpu.memory_space<any>> -> memref<128xf32, #tpu.memory_space<any>>
      %c0_i32_47 = arith.constant 0 : i32
      %68 = tpu.memref_slice %arg4[%61, %c0_i32_44, %c0_i32_47] : memref<2x8x128xf32, #tpu.memory_space<vmem>> -> memref<1x1x128xf32, #tpu.memory_space<vmem>>
      %69 = tpu.memref_squeeze %68 : memref<1x1x128xf32, #tpu.memory_space<vmem>> -> memref<128xf32, #tpu.memory_space<vmem>>
      %70 = tpu.memref_slice %arg5[%61, %c0_i32_45] : memref<2x8x!tpu.dma_semaphore, #tpu.memory_space<semaphore_mem>> -> memref<1x1x!tpu.dma_semaphore, #tpu.memory_space<semaphore_mem>>
      %71 = tpu.memref_squeeze %70 : memref<1x1x!tpu.dma_semaphore, #tpu.memory_space<semaphore_mem>> -> memref<!tpu.dma_semaphore, #tpu.memory_space<semaphore_mem>>
      tpu.enqueue_dma source(%67 : memref<128xf32, #tpu.memory_space<any>>) target(%69 : memref<128xf32, #tpu.memory_space<vmem>>) target_semaphore(%71 : memref<!tpu.dma_semaphore, #tpu.memory_space<semaphore_mem>>)
      %c1_i32_48 = arith.constant 1 : i32
      %72 = arith.addi %62, %c1_i32_48 : i32
      %73 = arith.index_cast %72 : i32 to index
      %74 = memref.load %arg1[%73] : memref<16xi32, #tpu.memory_space<smem>>
      %c1_i32_49 = arith.constant 1 : i32
      %c1_i32_50 = arith.constant 1 : i32
      %c0_i32_51 = arith.constant 0 : i32
      %75 = tpu.memref_slice %arg2[%74, %c0_i32_51] : memref<32x128xf32, #tpu.memory_space<any>> -> memref<1x128xf32, #tpu.memory_space<any>>
      %76 = tpu.memref_squeeze %75 : memref<1x128xf32, #tpu.memory_space<any>> -> memref<128xf32, #tpu.memory_space<any>>
      %c0_i32_52 = arith.constant 0 : i32
      %77 = tpu.memref_slice %arg4[%61, %c1_i32_49, %c0_i32_52] : memref<2x8x128xf32, #tpu.memory_space<vmem>> -> memref<1x1x128xf32, #tpu.memory_space<vmem>>
      %78 = tpu.memref_squeeze %77 : memref<1x1x128xf32, #tpu.memory_space<vmem>> -> memref<128xf32, #tpu.memory_space<vmem>>
      %79 = tpu.memref_slice %arg5[%61, %c1_i32_50] : memref<2x8x!tpu.dma_semaphore, #tpu.memory_space<semaphore_mem>> -> memref<1x1x!tpu.dma_semaphore, #tpu.memory_space<semaphore_mem>>
      %80 = tpu.memref_squeeze %79 : memref<1x1x!tpu.dma_semaphore, #tpu.memory_space<semaphore_mem>> -> memref<!tpu.dma_semaphore, #tpu.memory_space<semaphore_mem>>
      tpu.enqueue_dma source(%76 : memref<128xf32, #tpu.memory_space<any>>) target(%78 : memref<128xf32, #tpu.memory_space<vmem>>) target_semaphore(%80 : memref<!tpu.dma_semaphore, #tpu.memory_space<semaphore_mem>>)
      %c2_i32_53 = arith.constant 2 : i32
      %81 = arith.addi %62, %c2_i32_53 : i32
      %82 = arith.index_cast %81 : i32 to index
      %83 = memref.load %arg1[%82] : memref<16xi32, #tpu.memory_space<smem>>
      %c2_i32_54 = arith.constant 2 : i32
      %c2_i32_55 = arith.constant 2 : i32
      %c0_i32_56 = arith.constant 0 : i32
      %84 = tpu.memref_slice %arg2[%83, %c0_i32_56] : memref<32x128xf32, #tpu.memory_space<any>> -> memref<1x128xf32, #tpu.memory_space<any>>
      %85 = tpu.memref_squeeze %84 : memref<1x128xf32, #tpu.memory_space<any>> -> memref<128xf32, #tpu.memory_space<any>>
      %c0_i32_57 = arith.constant 0 : i32
      %86 = tpu.memref_slice %arg4[%61, %c2_i32_54, %c0_i32_57] : memref<2x8x128xf32, #tpu.memory_space<vmem>> -> memref<1x1x128xf32, #tpu.memory_space<vmem>>
      %87 = tpu.memref_squeeze %86 : memref<1x1x128xf32, #tpu.memory_space<vmem>> -> memref<128xf32, #tpu.memory_space<vmem>>
      %88 = tpu.memref_slice %arg5[%61, %c2_i32_55] : memref<2x8x!tpu.dma_semaphore, #tpu.memory_space<semaphore_mem>> -> memref<1x1x!tpu.dma_semaphore, #tpu.memory_space<semaphore_mem>>
      %89 = tpu.memref_squeeze %88 : memref<1x1x!tpu.dma_semaphore, #tpu.memory_space<semaphore_mem>> -> memref<!tpu.dma_semaphore, #tpu.memory_space<semaphore_mem>>
      tpu.enqueue_dma source(%85 : memref<128xf32, #tpu.memory_space<any>>) target(%87 : memref<128xf32, #tpu.memory_space<vmem>>) target_semaphore(%89 : memref<!tpu.dma_semaphore, #tpu.memory_space<semaphore_mem>>)
      %c3_i32_58 = arith.constant 3 : i32
      %90 = arith.addi %62, %c3_i32_58 : i32
      %91 = arith.index_cast %90 : i32 to index
      %92 = memref.load %arg1[%91] : memref<16xi32, #tpu.memory_space<smem>>
      %c3_i32_59 = arith.constant 3 : i32
      %c3_i32_60 = arith.constant 3 : i32
      %c0_i32_61 = arith.constant 0 : i32
      %93 = tpu.memref_slice %arg2[%92, %c0_i32_61] : memref<32x128xf32, #tpu.memory_space<any>> -> memref<1x128xf32, #tpu.memory_space<any>>
      %94 = tpu.memref_squeeze %93 : memref<1x128xf32, #tpu.memory_space<any>> -> memref<128xf32, #tpu.memory_space<any>>
      %c0_i32_62 = arith.constant 0 : i32
      %95 = tpu.memref_slice %arg4[%61, %c3_i32_59, %c0_i32_62] : memref<2x8x128xf32, #tpu.memory_space<vmem>> -> memref<1x1x128xf32, #tpu.memory_space<vmem>>
      %96 = tpu.memref_squeeze %95 : memref<1x1x128xf32, #tpu.memory_space<vmem>> -> memref<128xf32, #tpu.memory_space<vmem>>
      %97 = tpu.memref_slice %arg5[%61, %c3_i32_60] : memref<2x8x!tpu.dma_semaphore, #tpu.memory_space<semaphore_mem>> -> memref<1x1x!tpu.dma_semaphore, #tpu.memory_space<semaphore_mem>>
      %98 = tpu.memref_squeeze %97 : memref<1x1x!tpu.dma_semaphore, #tpu.memory_space<semaphore_mem>> -> memref<!tpu.dma_semaphore, #tpu.memory_space<semaphore_mem>>
      tpu.enqueue_dma source(%94 : memref<128xf32, #tpu.memory_space<any>>) target(%96 : memref<128xf32, #tpu.memory_space<vmem>>) target_semaphore(%98 : memref<!tpu.dma_semaphore, #tpu.memory_space<semaphore_mem>>)
      %c4_i32_63 = arith.constant 4 : i32
      %99 = arith.addi %62, %c4_i32_63 : i32
      %100 = arith.index_cast %99 : i32 to index
      %101 = memref.load %arg1[%100] : memref<16xi32, #tpu.memory_space<smem>>
      %c4_i32_64 = arith.constant 4 : i32
      %c4_i32_65 = arith.constant 4 : i32
      %c0_i32_66 = arith.constant 0 : i32
      %102 = tpu.memref_slice %arg2[%101, %c0_i32_66] : memref<32x128xf32, #tpu.memory_space<any>> -> memref<1x128xf32, #tpu.memory_space<any>>
      %103 = tpu.memref_squeeze %102 : memref<1x128xf32, #tpu.memory_space<any>> -> memref<128xf32, #tpu.memory_space<any>>
      %c0_i32_67 = arith.constant 0 : i32
      %104 = tpu.memref_slice %arg4[%61, %c4_i32_64, %c0_i32_67] : memref<2x8x128xf32, #tpu.memory_space<vmem>> -> memref<1x1x128xf32, #tpu.memory_space<vmem>>
      %105 = tpu.memref_squeeze %104 : memref<1x1x128xf32, #tpu.memory_space<vmem>> -> memref<128xf32, #tpu.memory_space<vmem>>
      %106 = tpu.memref_slice %arg5[%61, %c4_i32_65] : memref<2x8x!tpu.dma_semaphore, #tpu.memory_space<semaphore_mem>> -> memref<1x1x!tpu.dma_semaphore, #tpu.memory_space<semaphore_mem>>
      %107 = tpu.memref_squeeze %106 : memref<1x1x!tpu.dma_semaphore, #tpu.memory_space<semaphore_mem>> -> memref<!tpu.dma_semaphore, #tpu.memory_space<semaphore_mem>>
      tpu.enqueue_dma source(%103 : memref<128xf32, #tpu.memory_space<any>>) target(%105 : memref<128xf32, #tpu.memory_space<vmem>>) target_semaphore(%107 : memref<!tpu.dma_semaphore, #tpu.memory_space<semaphore_mem>>)
      %c5_i32_68 = arith.constant 5 : i32
      %108 = arith.addi %62, %c5_i32_68 : i32
      %109 = arith.index_cast %108 : i32 to index
      %110 = memref.load %arg1[%109] : memref<16xi32, #tpu.memory_space<smem>>
      %c5_i32_69 = arith.constant 5 : i32
      %c5_i32_70 = arith.constant 5 : i32
      %c0_i32_71 = arith.constant 0 : i32
      %111 = tpu.memref_slice %arg2[%110, %c0_i32_71] : memref<32x128xf32, #tpu.memory_space<any>> -> memref<1x128xf32, #tpu.memory_space<any>>
      %112 = tpu.memref_squeeze %111 : memref<1x128xf32, #tpu.memory_space<any>> -> memref<128xf32, #tpu.memory_space<any>>
      %c0_i32_72 = arith.constant 0 : i32
      %113 = tpu.memref_slice %arg4[%61, %c5_i32_69, %c0_i32_72] : memref<2x8x128xf32, #tpu.memory_space<vmem>> -> memref<1x1x128xf32, #tpu.memory_space<vmem>>
      %114 = tpu.memref_squeeze %113 : memref<1x1x128xf32, #tpu.memory_space<vmem>> -> memref<128xf32, #tpu.memory_space<vmem>>
      %115 = tpu.memref_slice %arg5[%61, %c5_i32_70] : memref<2x8x!tpu.dma_semaphore, #tpu.memory_space<semaphore_mem>> -> memref<1x1x!tpu.dma_semaphore, #tpu.memory_space<semaphore_mem>>
      %116 = tpu.memref_squeeze %115 : memref<1x1x!tpu.dma_semaphore, #tpu.memory_space<semaphore_mem>> -> memref<!tpu.dma_semaphore, #tpu.memory_space<semaphore_mem>>
      tpu.enqueue_dma source(%112 : memref<128xf32, #tpu.memory_space<any>>) target(%114 : memref<128xf32, #tpu.memory_space<vmem>>) target_semaphore(%116 : memref<!tpu.dma_semaphore, #tpu.memory_space<semaphore_mem>>)
      %c6_i32_73 = arith.constant 6 : i32
      %117 = arith.addi %62, %c6_i32_73 : i32
      %118 = arith.index_cast %117 : i32 to index
      %119 = memref.load %arg1[%118] : memref<16xi32, #tpu.memory_space<smem>>
      %c6_i32_74 = arith.constant 6 : i32
      %c6_i32_75 = arith.constant 6 : i32
      %c0_i32_76 = arith.constant 0 : i32
      %120 = tpu.memref_slice %arg2[%119, %c0_i32_76] : memref<32x128xf32, #tpu.memory_space<any>> -> memref<1x128xf32, #tpu.memory_space<any>>
      %121 = tpu.memref_squeeze %120 : memref<1x128xf32, #tpu.memory_space<any>> -> memref<128xf32, #tpu.memory_space<any>>
      %c0_i32_77 = arith.constant 0 : i32
      %122 = tpu.memref_slice %arg4[%61, %c6_i32_74, %c0_i32_77] : memref<2x8x128xf32, #tpu.memory_space<vmem>> -> memref<1x1x128xf32, #tpu.memory_space<vmem>>
      %123 = tpu.memref_squeeze %122 : memref<1x1x128xf32, #tpu.memory_space<vmem>> -> memref<128xf32, #tpu.memory_space<vmem>>
      %124 = tpu.memref_slice %arg5[%61, %c6_i32_75] : memref<2x8x!tpu.dma_semaphore, #tpu.memory_space<semaphore_mem>> -> memref<1x1x!tpu.dma_semaphore, #tpu.memory_space<semaphore_mem>>
      %125 = tpu.memref_squeeze %124 : memref<1x1x!tpu.dma_semaphore, #tpu.memory_space<semaphore_mem>> -> memref<!tpu.dma_semaphore, #tpu.memory_space<semaphore_mem>>
      tpu.enqueue_dma source(%121 : memref<128xf32, #tpu.memory_space<any>>) target(%123 : memref<128xf32, #tpu.memory_space<vmem>>) target_semaphore(%125 : memref<!tpu.dma_semaphore, #tpu.memory_space<semaphore_mem>>)
      %c7_i32_78 = arith.constant 7 : i32
      %126 = arith.addi %62, %c7_i32_78 : i32
      %127 = arith.index_cast %126 : i32 to index
      %128 = memref.load %arg1[%127] : memref<16xi32, #tpu.memory_space<smem>>
      %c7_i32_79 = arith.constant 7 : i32
      %c7_i32_80 = arith.constant 7 : i32
      %c0_i32_81 = arith.constant 0 : i32
      %129 = tpu.memref_slice %arg2[%128, %c0_i32_81] : memref<32x128xf32, #tpu.memory_space<any>> -> memref<1x128xf32, #tpu.memory_space<any>>
      %130 = tpu.memref_squeeze %129 : memref<1x128xf32, #tpu.memory_space<any>> -> memref<128xf32, #tpu.memory_space<any>>
      %c0_i32_82 = arith.constant 0 : i32
      %131 = tpu.memref_slice %arg4[%61, %c7_i32_79, %c0_i32_82] : memref<2x8x128xf32, #tpu.memory_space<vmem>> -> memref<1x1x128xf32, #tpu.memory_space<vmem>>
      %132 = tpu.memref_squeeze %131 : memref<1x1x128xf32, #tpu.memory_space<vmem>> -> memref<128xf32, #tpu.memory_space<vmem>>
      %133 = tpu.memref_slice %arg5[%61, %c7_i32_80] : memref<2x8x!tpu.dma_semaphore, #tpu.memory_space<semaphore_mem>> -> memref<1x1x!tpu.dma_semaphore, #tpu.memory_space<semaphore_mem>>
      %134 = tpu.memref_squeeze %133 : memref<1x1x!tpu.dma_semaphore, #tpu.memory_space<semaphore_mem>> -> memref<!tpu.dma_semaphore, #tpu.memory_space<semaphore_mem>>
      tpu.enqueue_dma source(%130 : memref<128xf32, #tpu.memory_space<any>>) target(%132 : memref<128xf32, #tpu.memory_space<vmem>>) target_semaphore(%134 : memref<!tpu.dma_semaphore, #tpu.memory_space<semaphore_mem>>)
    } else {
    }
    %c0_i32_3 = arith.constant 0 : i32
    %c0_i32_4 = arith.constant 0 : i32
    %c0_i32_5 = arith.constant 0 : i32
    %c0_i32_6 = arith.constant 0 : i32
    %8 = tpu.memref_slice %arg2[%c0_i32_3, %c0_i32_6] : memref<32x128xf32, #tpu.memory_space<any>> -> memref<1x128xf32, #tpu.memory_space<any>>
    %9 = tpu.memref_squeeze %8 : memref<1x128xf32, #tpu.memory_space<any>> -> memref<128xf32, #tpu.memory_space<any>>
    %c0_i32_7 = arith.constant 0 : i32
    %10 = tpu.memref_slice %arg4[%3, %c0_i32_4, %c0_i32_7] : memref<2x8x128xf32, #tpu.memory_space<vmem>> -> memref<1x1x128xf32, #tpu.memory_space<vmem>>
    %11 = tpu.memref_squeeze %10 : memref<1x1x128xf32, #tpu.memory_space<vmem>> -> memref<128xf32, #tpu.memory_space<vmem>>
    %12 = tpu.memref_slice %arg5[%3, %c0_i32_5] : memref<2x8x!tpu.dma_semaphore, #tpu.memory_space<semaphore_mem>> -> memref<1x1x!tpu.dma_semaphore, #tpu.memory_space<semaphore_mem>>
    %13 = tpu.memref_squeeze %12 : memref<1x1x!tpu.dma_semaphore, #tpu.memory_space<semaphore_mem>> -> memref<!tpu.dma_semaphore, #tpu.memory_space<semaphore_mem>>
    tpu.wait_dma2 semaphore(%13 : memref<!tpu.dma_semaphore, #tpu.memory_space<semaphore_mem>>) src(%9 : memref<128xf32, #tpu.memory_space<any>>) dst(%11 : memref<128xf32, #tpu.memory_space<vmem>>)
    %c0_i32_8 = arith.constant 0 : i32
    %c1_i32_9 = arith.constant 1 : i32
    %c1_i32_10 = arith.constant 1 : i32
    %c0_i32_11 = arith.constant 0 : i32
    %14 = tpu.memref_slice %arg2[%c0_i32_8, %c0_i32_11] : memref<32x128xf32, #tpu.memory_space<any>> -> memref<1x128xf32, #tpu.memory_space<any>>
    %15 = tpu.memref_squeeze %14 : memref<1x128xf32, #tpu.memory_space<any>> -> memref<128xf32, #tpu.memory_space<any>>
    %c0_i32_12 = arith.constant 0 : i32
    %16 = tpu.memref_slice %arg4[%3, %c1_i32_9, %c0_i32_12] : memref<2x8x128xf32, #tpu.memory_space<vmem>> -> memref<1x1x128xf32, #tpu.memory_space<vmem>>
    %17 = tpu.memref_squeeze %16 : memref<1x1x128xf32, #tpu.memory_space<vmem>> -> memref<128xf32, #tpu.memory_space<vmem>>
    %18 = tpu.memref_slice %arg5[%3, %c1_i32_10] : memref<2x8x!tpu.dma_semaphore, #tpu.memory_space<semaphore_mem>> -> memref<1x1x!tpu.dma_semaphore, #tpu.memory_space<semaphore_mem>>
    %19 = tpu.memref_squeeze %18 : memref<1x1x!tpu.dma_semaphore, #tpu.memory_space<semaphore_mem>> -> memref<!tpu.dma_semaphore, #tpu.memory_space<semaphore_mem>>
    tpu.wait_dma2 semaphore(%19 : memref<!tpu.dma_semaphore, #tpu.memory_space<semaphore_mem>>) src(%15 : memref<128xf32, #tpu.memory_space<any>>) dst(%17 : memref<128xf32, #tpu.memory_space<vmem>>)
    %c0_i32_13 = arith.constant 0 : i32
    %c2_i32_14 = arith.constant 2 : i32
    %c2_i32_15 = arith.constant 2 : i32
    %c0_i32_16 = arith.constant 0 : i32
    %20 = tpu.memref_slice %arg2[%c0_i32_13, %c0_i32_16] : memref<32x128xf32, #tpu.memory_space<any>> -> memref<1x128xf32, #tpu.memory_space<any>>
    %21 = tpu.memref_squeeze %20 : memref<1x128xf32, #tpu.memory_space<any>> -> memref<128xf32, #tpu.memory_space<any>>
    %c0_i32_17 = arith.constant 0 : i32
    %22 = tpu.memref_slice %arg4[%3, %c2_i32_14, %c0_i32_17] : memref<2x8x128xf32, #tpu.memory_space<vmem>> -> memref<1x1x128xf32, #tpu.memory_space<vmem>>
    %23 = tpu.memref_squeeze %22 : memref<1x1x128xf32, #tpu.memory_space<vmem>> -> memref<128xf32, #tpu.memory_space<vmem>>
    %24 = tpu.memref_slice %arg5[%3, %c2_i32_15] : memref<2x8x!tpu.dma_semaphore, #tpu.memory_space<semaphore_mem>> -> memref<1x1x!tpu.dma_semaphore, #tpu.memory_space<semaphore_mem>>
    %25 = tpu.memref_squeeze %24 : memref<1x1x!tpu.dma_semaphore, #tpu.memory_space<semaphore_mem>> -> memref<!tpu.dma_semaphore, #tpu.memory_space<semaphore_mem>>
    tpu.wait_dma2 semaphore(%25 : memref<!tpu.dma_semaphore, #tpu.memory_space<semaphore_mem>>) src(%21 : memref<128xf32, #tpu.memory_space<any>>) dst(%23 : memref<128xf32, #tpu.memory_space<vmem>>)
    %c0_i32_18 = arith.constant 0 : i32
    %c3_i32 = arith.constant 3 : i32
    %c3_i32_19 = arith.constant 3 : i32
    %c0_i32_20 = arith.constant 0 : i32
    %26 = tpu.memref_slice %arg2[%c0_i32_18, %c0_i32_20] : memref<32x128xf32, #tpu.memory_space<any>> -> memref<1x128xf32, #tpu.memory_space<any>>
    %27 = tpu.memref_squeeze %26 : memref<1x128xf32, #tpu.memory_space<any>> -> memref<128xf32, #tpu.memory_space<any>>
    %c0_i32_21 = arith.constant 0 : i32
    %28 = tpu.memref_slice %arg4[%3, %c3_i32, %c0_i32_21] : memref<2x8x128xf32, #tpu.memory_space<vmem>> -> memref<1x1x128xf32, #tpu.memory_space<vmem>>
    %29 = tpu.memref_squeeze %28 : memref<1x1x128xf32, #tpu.memory_space<vmem>> -> memref<128xf32, #tpu.memory_space<vmem>>
    %30 = tpu.memref_slice %arg5[%3, %c3_i32_19] : memref<2x8x!tpu.dma_semaphore, #tpu.memory_space<semaphore_mem>> -> memref<1x1x!tpu.dma_semaphore, #tpu.memory_space<semaphore_mem>>
    %31 = tpu.memref_squeeze %30 : memref<1x1x!tpu.dma_semaphore, #tpu.memory_space<semaphore_mem>> -> memref<!tpu.dma_semaphore, #tpu.memory_space<semaphore_mem>>
    tpu.wait_dma2 semaphore(%31 : memref<!tpu.dma_semaphore, #tpu.memory_space<semaphore_mem>>) src(%27 : memref<128xf32, #tpu.memory_space<any>>) dst(%29 : memref<128xf32, #tpu.memory_space<vmem>>)
    %c0_i32_22 = arith.constant 0 : i32
    %c4_i32 = arith.constant 4 : i32
    %c4_i32_23 = arith.constant 4 : i32
    %c0_i32_24 = arith.constant 0 : i32
    %32 = tpu.memref_slice %arg2[%c0_i32_22, %c0_i32_24] : memref<32x128xf32, #tpu.memory_space<any>> -> memref<1x128xf32, #tpu.memory_space<any>>
    %33 = tpu.memref_squeeze %32 : memref<1x128xf32, #tpu.memory_space<any>> -> memref<128xf32, #tpu.memory_space<any>>
    %c0_i32_25 = arith.constant 0 : i32
    %34 = tpu.memref_slice %arg4[%3, %c4_i32, %c0_i32_25] : memref<2x8x128xf32, #tpu.memory_space<vmem>> -> memref<1x1x128xf32, #tpu.memory_space<vmem>>
    %35 = tpu.memref_squeeze %34 : memref<1x1x128xf32, #tpu.memory_space<vmem>> -> memref<128xf32, #tpu.memory_space<vmem>>
    %36 = tpu.memref_slice %arg5[%3, %c4_i32_23] : memref<2x8x!tpu.dma_semaphore, #tpu.memory_space<semaphore_mem>> -> memref<1x1x!tpu.dma_semaphore, #tpu.memory_space<semaphore_mem>>
    %37 = tpu.memref_squeeze %36 : memref<1x1x!tpu.dma_semaphore, #tpu.memory_space<semaphore_mem>> -> memref<!tpu.dma_semaphore, #tpu.memory_space<semaphore_mem>>
    tpu.wait_dma2 semaphore(%37 : memref<!tpu.dma_semaphore, #tpu.memory_space<semaphore_mem>>) src(%33 : memref<128xf32, #tpu.memory_space<any>>) dst(%35 : memref<128xf32, #tpu.memory_space<vmem>>)
    %c0_i32_26 = arith.constant 0 : i32
    %c5_i32 = arith.constant 5 : i32
    %c5_i32_27 = arith.constant 5 : i32
    %c0_i32_28 = arith.constant 0 : i32
    %38 = tpu.memref_slice %arg2[%c0_i32_26, %c0_i32_28] : memref<32x128xf32, #tpu.memory_space<any>> -> memref<1x128xf32, #tpu.memory_space<any>>
    %39 = tpu.memref_squeeze %38 : memref<1x128xf32, #tpu.memory_space<any>> -> memref<128xf32, #tpu.memory_space<any>>
    %c0_i32_29 = arith.constant 0 : i32
    %40 = tpu.memref_slice %arg4[%3, %c5_i32, %c0_i32_29] : memref<2x8x128xf32, #tpu.memory_space<vmem>> -> memref<1x1x128xf32, #tpu.memory_space<vmem>>
    %41 = tpu.memref_squeeze %40 : memref<1x1x128xf32, #tpu.memory_space<vmem>> -> memref<128xf32, #tpu.memory_space<vmem>>
    %42 = tpu.memref_slice %arg5[%3, %c5_i32_27] : memref<2x8x!tpu.dma_semaphore, #tpu.memory_space<semaphore_mem>> -> memref<1x1x!tpu.dma_semaphore, #tpu.memory_space<semaphore_mem>>
    %43 = tpu.memref_squeeze %42 : memref<1x1x!tpu.dma_semaphore, #tpu.memory_space<semaphore_mem>> -> memref<!tpu.dma_semaphore, #tpu.memory_space<semaphore_mem>>
    tpu.wait_dma2 semaphore(%43 : memref<!tpu.dma_semaphore, #tpu.memory_space<semaphore_mem>>) src(%39 : memref<128xf32, #tpu.memory_space<any>>) dst(%41 : memref<128xf32, #tpu.memory_space<vmem>>)
    %c0_i32_30 = arith.constant 0 : i32
    %c6_i32 = arith.constant 6 : i32
    %c6_i32_31 = arith.constant 6 : i32
    %c0_i32_32 = arith.constant 0 : i32
    %44 = tpu.memref_slice %arg2[%c0_i32_30, %c0_i32_32] : memref<32x128xf32, #tpu.memory_space<any>> -> memref<1x128xf32, #tpu.memory_space<any>>
    %45 = tpu.memref_squeeze %44 : memref<1x128xf32, #tpu.memory_space<any>> -> memref<128xf32, #tpu.memory_space<any>>
    %c0_i32_33 = arith.constant 0 : i32
    %46 = tpu.memref_slice %arg4[%3, %c6_i32, %c0_i32_33] : memref<2x8x128xf32, #tpu.memory_space<vmem>> -> memref<1x1x128xf32, #tpu.memory_space<vmem>>
    %47 = tpu.memref_squeeze %46 : memref<1x1x128xf32, #tpu.memory_space<vmem>> -> memref<128xf32, #tpu.memory_space<vmem>>
    %48 = tpu.memref_slice %arg5[%3, %c6_i32_31] : memref<2x8x!tpu.dma_semaphore, #tpu.memory_space<semaphore_mem>> -> memref<1x1x!tpu.dma_semaphore, #tpu.memory_space<semaphore_mem>>
    %49 = tpu.memref_squeeze %48 : memref<1x1x!tpu.dma_semaphore, #tpu.memory_space<semaphore_mem>> -> memref<!tpu.dma_semaphore, #tpu.memory_space<semaphore_mem>>
    tpu.wait_dma2 semaphore(%49 : memref<!tpu.dma_semaphore, #tpu.memory_space<semaphore_mem>>) src(%45 : memref<128xf32, #tpu.memory_space<any>>) dst(%47 : memref<128xf32, #tpu.memory_space<vmem>>)
    %c0_i32_34 = arith.constant 0 : i32
    %c7_i32 = arith.constant 7 : i32
    %c7_i32_35 = arith.constant 7 : i32
    %c0_i32_36 = arith.constant 0 : i32
    %50 = tpu.memref_slice %arg2[%c0_i32_34, %c0_i32_36] : memref<32x128xf32, #tpu.memory_space<any>> -> memref<1x128xf32, #tpu.memory_space<any>>
    %51 = tpu.memref_squeeze %50 : memref<1x128xf32, #tpu.memory_space<any>> -> memref<128xf32, #tpu.memory_space<any>>
    %c0_i32_37 = arith.constant 0 : i32
    %52 = tpu.memref_slice %arg4[%3, %c7_i32, %c0_i32_37] : memref<2x8x128xf32, #tpu.memory_space<vmem>> -> memref<1x1x128xf32, #tpu.memory_space<vmem>>
    %53 = tpu.memref_squeeze %52 : memref<1x1x128xf32, #tpu.memory_space<vmem>> -> memref<128xf32, #tpu.memory_space<vmem>>
    %54 = tpu.memref_slice %arg5[%3, %c7_i32_35] : memref<2x8x!tpu.dma_semaphore, #tpu.memory_space<semaphore_mem>> -> memref<1x1x!tpu.dma_semaphore, #tpu.memory_space<semaphore_mem>>
    %55 = tpu.memref_squeeze %54 : memref<1x1x!tpu.dma_semaphore, #tpu.memory_space<semaphore_mem>> -> memref<!tpu.dma_semaphore, #tpu.memory_space<semaphore_mem>>
    tpu.wait_dma2 semaphore(%55 : memref<!tpu.dma_semaphore, #tpu.memory_space<semaphore_mem>>) src(%51 : memref<128xf32, #tpu.memory_space<any>>) dst(%53 : memref<128xf32, #tpu.memory_space<vmem>>)
    %56 = arith.index_cast %3 : i32 to index
    %c0 = arith.constant 0 : index
    %c0_38 = arith.constant 0 : index
    %57 = vector.load %arg4[%56, %c0, %c0_38] : memref<2x8x128xf32, #tpu.memory_space<vmem>>, vector<1x8x128xf32>
    %58 = vector.shape_cast %57 : vector<1x8x128xf32> to vector<8x128xf32>
    %c0_39 = arith.constant 0 : index
    %c0_40 = arith.constant 0 : index
    %59 = vector.load %arg3[%c0_39, %c0_40] : memref<8x128xf32, #tpu.memory_space<vmem>>, vector<8x128xf32>
    tpu.vector_store %arg3[%c0_39, %c0_40], %58 {strides = array<i32>} : memref<8x128xf32, #tpu.memory_space<vmem>>, vector<8x128xf32>,
    return
  }
  func.func @transform_1(%arg0: i32, %arg1: memref<16xi32, #tpu.memory_space<smem>>) -> (i32, i32) {
    %c0_i32 = arith.constant 0 : i32
    %c0_i32_0 = arith.constant 0 : i32
    return %arg0, %c0_i32 : i32, i32
  }
}

</mosaic_0001>

<llo_original>
// kernel: tpu_custom_call.1
$region0: #{tpu_custom_call.1}
  #allocation0 [shape = 'u32[]', space=smem, size = 0x4, offset = 0x4, fixed_abs, tag = 'smem constant byte address 0x4 - core index']
  #allocation1 [shape = 'u32[144,128]{1,0:T(1,128)}', space=vmem, size = 0x12000, scoped, tag = 'internal scratch']
  #allocation2 [shape = 'f32[2,8,128]{2,1,0:T(8,128)}', space=vmem, size = 0x2000, scoped, tag = 'scratch operand']
  #allocation3 [shape = 's32[16]{0}', space=sflag, size = 0x40, scoped, tag = 'scratch operand']
  #allocation4 [shape = 's32[1]{0}', space=sflag, size = 0x4, scoped, tag = 'scoped memory for tpu_custom_call.1']
  #allocation5 [shape = 'u8[512]{0}', space=smem, size = 0x200, scoped, tag = 'prefetched SMEM operand 0']
  #allocation8 [shape = 's32[]', space=sflag, size = 0x4, offset = 0, fixed_abs, tag = 'sflag constant byte address 0x0 - dummy sync flag']
  #allocation9 [shape = 's32[]', space=sflag, size = 0x4, offset = 0, fixed_abs, tag = 'sflag constant byte address 0x0 - dummy sync flag']
  #allocation10 [shape = 'u32[]', space=smem, size = 0x4, offset = 0x44, fixed_abs, tag = 'smem constant byte address 0x44 - assertion arg 0']
  #allocation11 [shape = 'u32[]', space=smem, size = 0x4, offset = 0x48, fixed_abs, tag = 'smem constant byte address 0x48 - assertion arg 1']
  #allocation12 [shape = 's32[]', space=sflag, size = 0x4, offset = 0, fixed_abs, tag = 'sflag constant byte address 0x0 - dummy sync flag']
  #allocation13 [shape = 's32[]', space=sflag, size = 0x4, offset = 0, fixed_abs, tag = 'sflag constant byte address 0x0 - dummy sync flag']
  #allocation14 [shape = 's32[]', space=sflag, size = 0x4, offset = 0, fixed_abs, tag = 'sflag constant byte address 0x0 - dummy sync flag']
  #allocation15 [shape = 's32[]', space=sflag, size = 0x4, offset = 0, fixed_abs, tag = 'sflag constant byte address 0x0 - dummy sync flag']
  #allocation16 [shape = 's32[]', space=sflag, size = 0x4, offset = 0, fixed_abs, tag = 'sflag constant byte address 0x0 - dummy sync flag']
  #allocation17 [shape = 's32[]', space=sflag, size = 0x4, offset = 0, fixed_abs, tag = 'sflag constant byte address 0x0 - dummy sync flag']
  #allocation18 [shape = 's32[]', space=sflag, size = 0x4, offset = 0, fixed_abs, tag = 'sflag constant byte address 0x0 - dummy sync flag']
  #allocation19 [shape = 's32[]', space=sflag, size = 0x4, offset = 0, fixed_abs, tag = 'sflag constant byte address 0x0 - dummy sync flag']
  #allocation20 [shape = 's32[]', space=sflag, size = 0x4, offset = 0, fixed_abs, tag = 'sflag constant byte address 0x0 - dummy sync flag']
  #allocation21 [shape = 's32[]', space=sflag, size = 0x4, offset = 0, fixed_abs, tag = 'sflag constant byte address 0x0 - dummy sync flag']
  #allocation22 [shape = 's32[]', space=sflag, size = 0x4, offset = 0, fixed_abs, tag = 'sflag constant byte address 0x0 - dummy sync flag']
  #allocation23 [shape = 's32[]', space=sflag, size = 0x4, offset = 0, fixed_abs, tag = 'sflag constant byte address 0x0 - dummy sync flag']
  #allocation24 [shape = 's32[]', space=sflag, size = 0x4, offset = 0, fixed_abs, tag = 'sflag constant byte address 0x0 - dummy sync flag']
  #allocation25 [shape = 's32[]', space=sflag, size = 0x4, offset = 0, fixed_abs, tag = 'sflag constant byte address 0x0 - dummy sync flag']
  #allocation26 [shape = 's32[]', space=sflag, size = 0x4, offset = 0, fixed_abs, tag = 'sflag constant byte address 0x0 - dummy sync flag']
  #allocation27 [shape = 's32[]', space=sflag, size = 0x4, offset = 0, fixed_abs, tag = 'sflag constant byte address 0x0 - dummy sync flag']
  #allocation28 [shape = 's32[]', space=sflag, size = 0x4, offset = 0, fixed_abs, tag = 'sflag constant byte address 0x0 - dummy sync flag']
  #allocation29 [shape = 's32[]', space=sflag, size = 0x4, offset = 0, fixed_abs, tag = 'sflag constant byte address 0x0 - dummy sync flag']
  #allocation30 [shape = 's32[]', space=sflag, size = 0x4, offset = 0, fixed_abs, tag = 'sflag constant byte address 0x0 - dummy sync flag']
  #allocation31 [shape = 's32[]', space=sflag, size = 0x4, offset = 0, fixed_abs, tag = 'sflag constant byte address 0x0 - dummy sync flag']
  #allocation32 [shape = 's32[]', space=sflag, size = 0x4, offset = 0, fixed_abs, tag = 'sflag constant byte address 0x0 - dummy sync flag']
  #allocation33 [shape = 's32[]', space=sflag, size = 0x4, offset = 0, fixed_abs, tag = 'sflag constant byte address 0x0 - dummy sync flag']
  #allocation34 [shape = 's32[]', space=sflag, size = 0x4, offset = 0, fixed_abs, tag = 'sflag constant byte address 0x0 - dummy sync flag']
  #allocation35 [shape = 's32[]', space=sflag, size = 0x4, offset = 0, fixed_abs, tag = 'sflag constant byte address 0x0 - dummy sync flag']
  #allocation36 [shape = 's32[]', space=sflag, size = 0x4, offset = 0, fixed_abs, tag = 'sflag constant byte address 0x0 - dummy sync flag']
  #allocation37 [shape = 's32[]', space=sflag, size = 0x4, offset = 0, fixed_abs, tag = 'sflag constant byte address 0x0 - dummy sync flag']
  #allocation38 [shape = 's32[]', space=sflag, size = 0x4, offset = 0, fixed_abs, tag = 'sflag constant byte address 0x0 - dummy sync flag']
  #allocation39 [shape = 's32[]', space=sflag, size = 0x4, offset = 0, fixed_abs, tag = 'sflag constant byte address 0x0 - dummy sync flag']
  #allocation40 [shape = 's32[]', space=sflag, size = 0x4, offset = 0, fixed_abs, tag = 'sflag constant byte address 0x0 - dummy sync flag']
  #allocation41 [shape = 's32[]', space=sflag, size = 0x4, offset = 0, fixed_abs, tag = 'sflag constant byte address 0x0 - dummy sync flag']
  %s0 = inlined_call_operand.hbm [shape: s32[16], index: 0, kind: input, shape index: {}]
  %s1 = inlined_call_operand.hbm [shape: f32[32,128], index: 1, kind: input, shape index: {}]
  %s2 = inlined_call_operand.hbm [shape: f32[16,128], index: 2, kind: output, shape index: {}]
  %s3 = sld [smem:[#allocation0]]
  $region97: #{tpu_custom_call.1} parent=0
    _
  %s5 = ssub.s32 1, %s3
  %s6 = scalar_select 0, %s5, %s3
  %8 = dma.hbm_to_smem %s0, 16, [#allocation5], [#allocation4]
  %9 = dma.done [#allocation4], 16
  %10 = sfence
  $region1: #{tpu_custom_call.1} parent=0
    #allocation6 [shape = 'u8[8192]{0}', space=vmem, size = 0x2000, scoped, tag = 'output window, operand 0']
    #allocation7 [shape = 's32[2]{0}', space=sflag, size = 0x8, scoped, tag = 'scoped memory for tpu_custom_call.1']
    %11 = vsyncpa [#allocation7], 0
    %s12 = scalar_lea.sflag [#allocation7], 1
    %13 = vsyncpa %s12, 0
    loop: start=0, step=1, limit=3
    $region2: #{tpu_custom_call.1} parent=1 // loop_pre_header
      _
    $region3: #{tpu_custom_call.1} parent=1 // loop_header
      %s15 = sphi 0, %s19
      %p16 = scmp.ge.s32.totalorder %s15, 3
      %s24 = sphi 0, %s26
      %s27 = sphi 0, %s24
      %s37 = sphi 0, %s27
    $region4: #{tpu_custom_call.1} parent=1 // loop_header_branch
      %18 = sbr.rel (%p16) target = $region8
    $region5: #{tpu_custom_call.1} parent=1 // loop_body
      %s20 = ssub.s32 %s15, 1
      %s21 = sadd.s32 %s15, 1
      %s22 = ssub.s32 %s15, %s21
      %p23 = scmp.eq.s32.totalorder %s22, 0
      %s25 = sadd.s32 %s24, 1
      %s26 = scalar_select %p23, %s24, %s25
      %p28 = pneg %p23
      %p29 = scmp.eq.s32.totalorder %s15, 1
      %p30 = por %p28, %p29
      %p31 = scmp.ne.s32.totalorder %s24, %s27
      %p32 = scmp.eq.s32.totalorder %s15, 0
      %p33 = por %p31, %p32
      %p34 = scmp.ne.s32.totalorder %s24, %s27
      %p35 = scmp.eq.s32.totalorder %s20, 1
      %p36 = por %p34, %p35
      %p38 = scmp.ne.s32.totalorder %s27, %s37
      %p39 = scmp.eq.s32.totalorder %s20, 0
      %p40 = por %p38, %p39
      %p41 = scmp.lt.s32.totalorder %s15, 2
      // Predicated region
      $region9: #{tpu_custom_call.1} parent=5 // pred_check
        %p42 = pneg %p41
      $region10: #{tpu_custom_call.1} parent=5 // pred_check_branch
        %44 = sbr.rel (%p42) target = $region12
      $region11: #{tpu_custom_call.1} parent=5 // pred_region
        %p45 = pneg %p33
        %p46 = pneg %p30
        %s47 = sand.u32 %s24, 1
        %s48 = scalar_lea.sflag [#allocation7], %s47
        %s49 = sand.u32 %s24, 1
        %s50 = smul.addr %s49, 8
        %s51 = scalar_lea.vmem [#allocation6], %s50
        %p52 = scmp.eq.s32.totalorder %s15, 0
        // Predicated region
        $region13: #{tpu_custom_call.1} parent=11 // pred_check
          %p53 = pneg %p52
        $region14: #{tpu_custom_call.1} parent=11 // pred_check_branch
          %55 = sbr.rel (%p53) target = $region16
        $region15: #{tpu_custom_call.1} parent=11 // pred_region
          %s56 = sld [smem:[#allocation5]]
          %s57 = smul.addr %s56, 16
          %s58 = scalar_lea.hbm %s1, %s57
          // Predicated region
          $region17: #{tpu_custom_call.1} parent=15 // pred_check
            _
          $region18: #{tpu_custom_call.1} parent=15 // pred_check_branch
            %60 = sbr.rel target = $region20
          $region19: #{tpu_custom_call.1} parent=15 // pred_region
            %61 = sst [smem:[#allocation10]] [#allocation9]
            %62 = sst [smem:[#allocation11]] [#allocation8]
          $region20: #{tpu_custom_call.1} parent=15 // pred_fallthru
            _
          %64 = shalt.err (0)
          %s66 = sshll.u32 [#allocation2], 4
          %s67 = int_to_ptr.vmem [resolvable:$true] %s66
          %69 = dma.hbm_to_vmem [thread:$0]  %s58, 16, %s67, [#allocation3]
          %s70 = sld [smem:[#allocation5 + $0x1]]
          %s71 = smul.addr %s70, 16
          %s72 = scalar_lea.hbm %s1, %s71
          %s73 = scalar_lea.vmem [#allocation2], 1
          %s74 = scalar_lea.sflag [#allocation3], 1
          // Predicated region
          $region21: #{tpu_custom_call.1} parent=15 // pred_check
            _
          $region22: #{tpu_custom_call.1} parent=15 // pred_check_branch
            %76 = sbr.rel target = $region24
          $region23: #{tpu_custom_call.1} parent=15 // pred_region
            %77 = sst [smem:[#allocation10]] [#allocation13]
            %78 = sst [smem:[#allocation11]] [#allocation12]
          $region24: #{tpu_custom_call.1} parent=15 // pred_fallthru
            _
          %80 = shalt.err (0)
          %s82 = sshll.u32 %s73, 4
          %s83 = int_to_ptr.vmem [resolvable:$true] %s82
          %85 = dma.hbm_to_vmem [thread:$0]  %s72, 16, %s83, %s74
          %s86 = sld [smem:[#allocation5 + $0x2]]
          %s87 = smul.addr %s86, 16
          %s88 = scalar_lea.hbm %s1, %s87
          %s89 = scalar_lea.vmem [#allocation2], 2
          %s90 = scalar_lea.sflag [#allocation3], 2
          // Predicated region
          $region25: #{tpu_custom_call.1} parent=15 // pred_check
            _
          $region26: #{tpu_custom_call.1} parent=15 // pred_check_branch
            %92 = sbr.rel target = $region28
          $region27: #{tpu_custom_call.1} parent=15 // pred_region
            %93 = sst [smem:[#allocation10]] [#allocation15]
            %94 = sst [smem:[#allocation11]] [#allocation14]
          $region28: #{tpu_custom_call.1} parent=15 // pred_fallthru
            _
          %96 = shalt.err (0)
          %s98 = sshll.u32 %s89, 4
          %s99 = int_to_ptr.vmem [resolvable:$true] %s98
          %101 = dma.hbm_to_vmem [thread:$0]  %s88, 16, %s99, %s90
          %s102 = sld [smem:[#allocation5 + $0x3]]
          %s103 = smul.addr %s102, 16
          %s104 = scalar_lea.hbm %s1, %s103
          %s105 = scalar_lea.vmem [#allocation2], 3
          %s106 = scalar_lea.sflag [#allocation3], 3
          // Predicated region
          $region29: #{tpu_custom_call.1} parent=15 // pred_check
            _
          $region30: #{tpu_custom_call.1} parent=15 // pred_check_branch
            %108 = sbr.rel target = $region32
          $region31: #{tpu_custom_call.1} parent=15 // pred_region
            %109 = sst [smem:[#allocation10]] [#allocation17]
            %110 = sst [smem:[#allocation11]] [#allocation16]
          $region32: #{tpu_custom_call.1} parent=15 // pred_fallthru
            _
          %112 = shalt.err (0)
          %s114 = sshll.u32 %s105, 4
          %s115 = int_to_ptr.vmem [resolvable:$true] %s114
          %117 = dma.hbm_to_vmem [thread:$0]  %s104, 16, %s115, %s106
          %s118 = sld [smem:[#allocation5 + $0x4]]
          %s119 = smul.addr %s118, 16
          %s120 = scalar_lea.hbm %s1, %s119
          %s121 = scalar_lea.vmem [#allocation2], 4
          %s122 = scalar_lea.sflag [#allocation3], 4
          // Predicated region
          $region33: #{tpu_custom_call.1} parent=15 // pred_check
            _
          $region34: #{tpu_custom_call.1} parent=15 // pred_check_branch
            %124 = sbr.rel target = $region36
          $region35: #{tpu_custom_call.1} parent=15 // pred_region
            %125 = sst [smem:[#allocation10]] [#allocation19]
            %126 = sst [smem:[#allocation11]] [#allocation18]
          $region36: #{tpu_custom_call.1} parent=15 // pred_fallthru
            _
          %128 = shalt.err (0)
          %s130 = sshll.u32 %s121, 4
          %s131 = int_to_ptr.vmem [resolvable:$true] %s130
          %133 = dma.hbm_to_vmem [thread:$0]  %s120, 16, %s131, %s122
          %s134 = sld [smem:[#allocation5 + $0x5]]
          %s135 = smul.addr %s134, 16
          %s136 = scalar_lea.hbm %s1, %s135
          %s137 = scalar_lea.vmem [#allocation2], 5
          %s138 = scalar_lea.sflag [#allocation3], 5
          // Predicated region
          $region37: #{tpu_custom_call.1} parent=15 // pred_check
            _
          $region38: #{tpu_custom_call.1} parent=15 // pred_check_branch
            %140 = sbr.rel target = $region40
          $region39: #{tpu_custom_call.1} parent=15 // pred_region
            %141 = sst [smem:[#allocation10]] [#allocation21]
            %142 = sst [smem:[#allocation11]] [#allocation20]
          $region40: #{tpu_custom_call.1} parent=15 // pred_fallthru
            _
          %144 = shalt.err (0)
          %s146 = sshll.u32 %s137, 4
          %s147 = int_to_ptr.vmem [resolvable:$true] %s146
          %149 = dma.hbm_to_vmem [thread:$0]  %s136, 16, %s147, %s138
          %s150 = sld [smem:[#allocation5 + $0x6]]
          %s151 = smul.addr %s150, 16
          %s152 = scalar_lea.hbm %s1, %s151
          %s153 = scalar_lea.vmem [#allocation2], 6
          %s154 = scalar_lea.sflag [#allocation3], 6
          // Predicated region
          $region41: #{tpu_custom_call.1} parent=15 // pred_check
            _
          $region42: #{tpu_custom_call.1} parent=15 // pred_check_branch
            %156 = sbr.rel target = $region44
          $region43: #{tpu_custom_call.1} parent=15 // pred_region
            %157 = sst [smem:[#allocation10]] [#allocation23]
            %158 = sst [smem:[#allocation11]] [#allocation22]
          $region44: #{tpu_custom_call.1} parent=15 // pred_fallthru
            _
          %160 = shalt.err (0)
          %s162 = sshll.u32 %s153, 4
          %s163 = int_to_ptr.vmem [resolvable:$true] %s162
          %165 = dma.hbm_to_vmem [thread:$0]  %s152, 16, %s163, %s154
          %s166 = sld [smem:[#allocation5 + $0x7]]
          %s167 = smul.addr %s166, 16
          %s168 = scalar_lea.hbm %s1, %s167
          %s169 = scalar_lea.vmem [#allocation2], 7
          %s170 = scalar_lea.sflag [#allocation3], 7
          // Predicated region
          $region45: #{tpu_custom_call.1} parent=15 // pred_check
            _
          $region46: #{tpu_custom_call.1} parent=15 // pred_check_branch
            %172 = sbr.rel target = $region48
          $region47: #{tpu_custom_call.1} parent=15 // pred_region
            %173 = sst [smem:[#allocation10]] [#allocation25]
            %174 = sst [smem:[#allocation11]] [#allocation24]
          $region48: #{tpu_custom_call.1} parent=15 // pred_fallthru
            _
          %176 = shalt.err (0)
          %s178 = sshll.u32 %s169, 4
          %s179 = int_to_ptr.vmem [resolvable:$true] %s178
          %181 = dma.hbm_to_vmem [thread:$0]  %s168, 16, %s179, %s170
        $region16: #{tpu_custom_call.1} parent=11 // pred_fallthru
          _
        %p182 = scmp.lt.s32.totalorder %s15, 0
        %s183 = ssub.s32 0, %s15
        %s184 = scalar_select %p182, %s183, %s15
        %s185 = sand.u32 %s184, 1
        %s186 = ssub.s32 0, %s185
        %s187 = scalar_select %p182, %s186, %s185
        %s188 = sadd.s32 %s15, 1
        %p189 = scmp.lt.s32.totalorder %s188, 2
        // Predicated region
        $region49: #{tpu_custom_call.1} parent=11 // pred_check
          %p190 = pneg %p189
        $region50: #{tpu_custom_call.1} parent=11 // pred_check_branch
          %192 = sbr.rel (%p190) target = $region52
        $region51: #{tpu_custom_call.1} parent=11 // pred_region
          %s193 = ssub.s32 1, %s187
          %s194 = smul.u32 %s188, 8
          %s195 = sld [smem:[#allocation5 + %s194]]
          %s196 = smul.addr %s195, 16
          %s197 = scalar_lea.hbm %s1, %s196
          %s198 = smul.u32 %s193, 8
          %s199 = scalar_lea.vmem [#allocation2], %s198
          %s200 = scalar_lea.sflag [#allocation3], %s198
          // Predicated region
          $region53: #{tpu_custom_call.1} parent=51 // pred_check
            _
          $region54: #{tpu_custom_call.1} parent=51 // pred_check_branch
            %202 = sbr.rel target = $region56
          $region55: #{tpu_custom_call.1} parent=51 // pred_region
            %203 = sst [smem:[#allocation10]] [#allocation27]
            %204 = sst [smem:[#allocation11]] [#allocation26]
          $region56: #{tpu_custom_call.1} parent=51 // pred_fallthru
            _
          %206 = shalt.err (0)
          %s208 = sshll.u32 %s199, 4
          %s209 = int_to_ptr.vmem [resolvable:$true] %s208
          %211 = dma.hbm_to_vmem [thread:$0]  %s197, 16, %s209, %s200
          %s212 = sadd.s32 %s194, 1
          %s213 = sld [smem:[#allocation5 + %s212]]
          %s214 = smul.addr %s213, 16
          %s215 = scalar_lea.hbm %s1, %s214
          %s216 = sadd.s32 1, %s198
          %s217 = scalar_lea.vmem [#allocation2], %s216
          %s218 = scalar_lea.sflag [#allocation3], %s216
          // Predicated region
          $region57: #{tpu_custom_call.1} parent=51 // pred_check
            _
          $region58: #{tpu_custom_call.1} parent=51 // pred_check_branch
            %220 = sbr.rel target = $region60
          $region59: #{tpu_custom_call.1} parent=51 // pred_region
            %221 = sst [smem:[#allocation10]] [#allocation29]
            %222 = sst [smem:[#allocation11]] [#allocation28]
          $region60: #{tpu_custom_call.1} parent=51 // pred_fallthru
            _
          %224 = shalt.err (0)
          %s226 = sshll.u32 %s217, 4
          %s227 = int_to_ptr.vmem [resolvable:$true] %s226
          %229 = dma.hbm_to_vmem [thread:$0]  %s215, 16, %s227, %s218
          %s230 = sadd.s32 %s194, 2
          %s231 = sld [smem:[#allocation5 + %s230]]
          %s232 = smul.addr %s231, 16
          %s233 = scalar_lea.hbm %s1, %s232
          %s234 = sadd.s32 2, %s198
          %s235 = scalar_lea.vmem [#allocation2], %s234
          %s236 = scalar_lea.sflag [#allocation3], %s234
          // Predicated region
          $region61: #{tpu_custom_call.1} parent=51 // pred_check
            _
          $region62: #{tpu_custom_call.1} parent=51 // pred_check_branch
            %238 = sbr.rel target = $region64
          $region63: #{tpu_custom_call.1} parent=51 // pred_region
            %239 = sst [smem:[#allocation10]] [#allocation31]
            %240 = sst [smem:[#allocation11]] [#allocation30]
          $region64: #{tpu_custom_call.1} parent=51 // pred_fallthru
            _
          %242 = shalt.err (0)
          %s244 = sshll.u32 %s235, 4
          %s245 = int_to_ptr.vmem [resolvable:$true] %s244
          %247 = dma.hbm_to_vmem [thread:$0]  %s233, 16, %s245, %s236
          %s248 = sadd.s32 %s194, 3
          %s249 = sld [smem:[#allocation5 + %s248]]
          %s250 = smul.addr %s249, 16
          %s251 = scalar_lea.hbm %s1, %s250
          %s252 = sadd.s32 3, %s198
          %s253 = scalar_lea.vmem [#allocation2], %s252
          %s254 = scalar_lea.sflag [#allocation3], %s252
          // Predicated region
          $region65: #{tpu_custom_call.1} parent=51 // pred_check
            _
          $region66: #{tpu_custom_call.1} parent=51 // pred_check_branch
            %256 = sbr.rel target = $region68
          $region67: #{tpu_custom_call.1} parent=51 // pred_region
            %257 = sst [smem:[#allocation10]] [#allocation33]
            %258 = sst [smem:[#allocation11]] [#allocation32]
          $region68: #{tpu_custom_call.1} parent=51 // pred_fallthru
            _
          %260 = shalt.err (0)
          %s262 = sshll.u32 %s253, 4
          %s263 = int_to_ptr.vmem [resolvable:$true] %s262
          %265 = dma.hbm_to_vmem [thread:$0]  %s251, 16, %s263, %s254
          %s266 = sadd.s32 %s194, 4
          %s267 = sld [smem:[#allocation5 + %s266]]
          %s268 = smul.addr %s267, 16
          %s269 = scalar_lea.hbm %s1, %s268
          %s270 = sadd.s32 4, %s198
          %s271 = scalar_lea.vmem [#allocation2], %s270
          %s272 = scalar_lea.sflag [#allocation3], %s270
          // Predicated region
          $region69: #{tpu_custom_call.1} parent=51 // pred_check
            _
          $region70: #{tpu_custom_call.1} parent=51 // pred_check_branch
            %274 = sbr.rel target = $region72
          $region71: #{tpu_custom_call.1} parent=51 // pred_region
            %275 = sst [smem:[#allocation10]] [#allocation35]
            %276 = sst [smem:[#allocation11]] [#allocation34]
          $region72: #{tpu_custom_call.1} parent=51 // pred_fallthru
            _
          %278 = shalt.err (0)
          %s280 = sshll.u32 %s271, 4
          %s281 = int_to_ptr.vmem [resolvable:$true] %s280
          %283 = dma.hbm_to_vmem [thread:$0]  %s269, 16, %s281, %s272
          %s284 = sadd.s32 %s194, 5
          %s285 = sld [smem:[#allocation5 + %s284]]
          %s286 = smul.addr %s285, 16
          %s287 = scalar_lea.hbm %s1, %s286
          %s288 = sadd.s32 5, %s198
          %s289 = scalar_lea.vmem [#allocation2], %s288
          %s290 = scalar_lea.sflag [#allocation3], %s288
          // Predicated region
          $region73: #{tpu_custom_call.1} parent=51 // pred_check
            _
          $region74: #{tpu_custom_call.1} parent=51 // pred_check_branch
            %292 = sbr.rel target = $region76
          $region75: #{tpu_custom_call.1} parent=51 // pred_region
            %293 = sst [smem:[#allocation10]] [#allocation37]
            %294 = sst [smem:[#allocation11]] [#allocation36]
          $region76: #{tpu_custom_call.1} parent=51 // pred_fallthru
            _
          %296 = shalt.err (0)
          %s298 = sshll.u32 %s289, 4
          %s299 = int_to_ptr.vmem [resolvable:$true] %s298
          %301 = dma.hbm_to_vmem [thread:$0]  %s287, 16, %s299, %s290
          %s302 = sadd.s32 %s194, 6
          %s303 = sld [smem:[#allocation5 + %s302]]
          %s304 = smul.addr %s303, 16
          %s305 = scalar_lea.hbm %s1, %s304
          %s306 = sadd.s32 6, %s198
          %s307 = scalar_lea.vmem [#allocation2], %s306
          %s308 = scalar_lea.sflag [#allocation3], %s306
          // Predicated region
          $region77: #{tpu_custom_call.1} parent=51 // pred_check
            _
          $region78: #{tpu_custom_call.1} parent=51 // pred_check_branch
            %310 = sbr.rel target = $region80
          $region79: #{tpu_custom_call.1} parent=51 // pred_region
            %311 = sst [smem:[#allocation10]] [#allocation39]
            %312 = sst [smem:[#allocation11]] [#allocation38]
          $region80: #{tpu_custom_call.1} parent=51 // pred_fallthru
            _
          %314 = shalt.err (0)
          %s316 = sshll.u32 %s307, 4
          %s317 = int_to_ptr.vmem [resolvable:$true] %s316
          %319 = dma.hbm_to_vmem [thread:$0]  %s305, 16, %s317, %s308
          %s320 = sadd.s32 %s194, 7
          %s321 = sld [smem:[#allocation5 + %s320]]
          %s322 = smul.addr %s321, 16
          %s323 = scalar_lea.hbm %s1, %s322
          %s324 = sadd.s32 7, %s198
          %s325 = scalar_lea.vmem [#allocation2], %s324
          %s326 = scalar_lea.sflag [#allocation3], %s324
          // Predicated region
          $region81: #{tpu_custom_call.1} parent=51 // pred_check
            _
          $region82: #{tpu_custom_call.1} parent=51 // pred_check_branch
            %328 = sbr.rel target = $region84
          $region83: #{tpu_custom_call.1} parent=51 // pred_region
            %329 = sst [smem:[#allocation10]] [#allocation41]
            %330 = sst [smem:[#allocation11]] [#allocation40]
          $region84: #{tpu_custom_call.1} parent=51 // pred_fallthru
            _
          %332 = shalt.err (0)
          %s334 = sshll.u32 %s325, 4
          %s335 = int_to_ptr.vmem [resolvable:$true] %s334
          %337 = dma.hbm_to_vmem [thread:$0]  %s323, 16, %s335, %s326
        $region52: #{tpu_custom_call.1} parent=11 // pred_fallthru
          _
        %s338 = smul.u32 %s187, 8
        %s339 = scalar_lea.sflag [#allocation3], %s338
        %341 = dma.done %s339, 16
        %s342 = sadd.s32 1, %s338
        %s343 = scalar_lea.sflag [#allocation3], %s342
        %345 = dma.done %s343, 16
        %s346 = sadd.s32 2, %s338
        %s347 = scalar_lea.sflag [#allocation3], %s346
        %349 = dma.done %s347, 16
        %s350 = sadd.s32 3, %s338
        %s351 = scalar_lea.sflag [#allocation3], %s350
        %353 = dma.done %s351, 16
        %s354 = sadd.s32 4, %s338
        %s355 = scalar_lea.sflag [#allocation3], %s354
        %357 = dma.done %s355, 16
        %s358 = sadd.s32 5, %s338
        %s359 = scalar_lea.sflag [#allocation3], %s358
        %361 = dma.done %s359, 16
        %s362 = sadd.s32 6, %s338
        %s363 = scalar_lea.sflag [#allocation3], %s362
        %365 = dma.done %s363, 16
        %s366 = sadd.s32 7, %s338
        %s367 = scalar_lea.sflag [#allocation3], %s366
        %369 = dma.done %s367, 16
        %s370 = scalar_lea.vmem [#allocation2], %s338
        %v371 = vld [vmem:[%s370] sm:$0xff]
        %372 = vst [vmem:[%s51] sm:$0xff] %v371
        %s373 = sand.u32 %s24, 1
        %s374 = scalar_lea.sflag [#allocation7], %s373
        %s375 = sand.u32 %s24, 1
        %s376 = smul.addr %s375, 8
        %s377 = scalar_lea.vmem [#allocation6], %s376
        // Predicated region
        $region85: #{tpu_custom_call.1} parent=11 // pred_check
          %p378 = pneg %p30
        $region86: #{tpu_custom_call.1} parent=11 // pred_check_branch
          %380 = sbr.rel (%p378) target = $region88
        $region87: #{tpu_custom_call.1} parent=11 // pred_region
          %s382 = ssub.s32 128, 128
          %383 = vsyncadd %s374, %s382
          %s384 = smul.addr %s15, 128
          %s385 = scalar_lea.hbm %s2, %s384
          %s387 = sshll.u32 %s377, 4
          %s388 = int_to_ptr.vmem [resolvable:$true] %s387
          %390 = dma.vmem_to_hbm [thread:$0]  %s388, 128, %s385, %s374
        $region88: #{tpu_custom_call.1} parent=11 // pred_fallthru
          _
      $region12: #{tpu_custom_call.1} parent=5 // pred_fallthru
        _
      %p391 = scmp.le.s32.totalorder 1, %s15
      // Predicated region
      $region89: #{tpu_custom_call.1} parent=5 // pred_check
        %p392 = pneg %p391
      $region90: #{tpu_custom_call.1} parent=5 // pred_check_branch
        %394 = sbr.rel (%p392) target = $region92
      $region91: #{tpu_custom_call.1} parent=5 // pred_region
        %s395 = ssub.s32 %s15, 1
        // Predicated region
        $region93: #{tpu_custom_call.1} parent=91 // pred_check
          %p396 = pneg %p36
        $region94: #{tpu_custom_call.1} parent=91 // pred_check_branch
          %398 = sbr.rel (%p396) target = $region96
        $region95: #{tpu_custom_call.1} parent=91 // pred_region
          %s399 = sand.u32 %s27, 1
          %s400 = scalar_lea.sflag [#allocation7], %s399
          %s401 = sand.u32 %s27, 1
          %s402 = smul.addr %s401, 8
          %s403 = scalar_lea.vmem [#allocation6], %s402
          %404 = dma.done %s400, 128
        $region96: #{tpu_custom_call.1} parent=91 // pred_fallthru
          _
      $region92: #{tpu_custom_call.1} parent=5 // pred_fallthru
        _
    $region6: #{tpu_custom_call.1} parent=1 // loop_footer
      %s19 = sadd.s32 1, %s15
    $region7: #{tpu_custom_call.1} parent=1 // loop_footer_branch
      %14 = sbr.rel target = $region3
    $region8: #{tpu_custom_call.1} parent=1 // loop_exit
      _
    %405 = vsyncpa [#allocation7], 1
    %s406 = scalar_lea.sflag [#allocation7], 1
    %407 = vsyncpa %s406, 1
  %408 = vsyncmov [#allocation3]
  %s409 = vpop.sfrf %408
  %p410 = scmp.eq.s32.totalorder %s409, 0
  %p411 = pneg %p410
  %413 = shalt.err (%p411)
  %s414 = scalar_lea.sflag [#allocation3], 1
  %415 = vsyncmov %s414
  %s416 = vpop.sfrf %415
  %p417 = scmp.eq.s32.totalorder %s416, 0
  %p418 = pneg %p417
  %420 = shalt.err (%p418)
  %s421 = scalar_lea.sflag [#allocation3], 2
  %422 = vsyncmov %s421
  %s423 = vpop.sfrf %422
  %p424 = scmp.eq.s32.totalorder %s423, 0
  %p425 = pneg %p424
  %427 = shalt.err (%p425)
  %s428 = scalar_lea.sflag [#allocation3], 3
  %429 = vsyncmov %s428
  %s430 = vpop.sfrf %429
  %p431 = scmp.eq.s32.totalorder %s430, 0
  %p432 = pneg %p431
  %434 = shalt.err (%p432)
  %s435 = scalar_lea.sflag [#allocation3], 4
  %436 = vsyncmov %s435
  %s437 = vpop.sfrf %436
  %p438 = scmp.eq.s32.totalorder %s437, 0
  %p439 = pneg %p438
  %441 = shalt.err (%p439)
  %s442 = scalar_lea.sflag [#allocation3], 5
  %443 = vsyncmov %s442
  %s444 = vpop.sfrf %443
  %p445 = scmp.eq.s32.totalorder %s444, 0
  %p446 = pneg %p445
  %448 = shalt.err (%p446)
  %s449 = scalar_lea.sflag [#allocation3], 6
  %450 = vsyncmov %s449
  %s451 = vpop.sfrf %450
  %p452 = scmp.eq.s32.totalorder %s451, 0
  %p453 = pneg %p452
  %455 = shalt.err (%p453)
  %s456 = scalar_lea.sflag [#allocation3], 7
  %457 = vsyncmov %s456
  %s458 = vpop.sfrf %457
  %p459 = scmp.eq.s32.totalorder %s458, 0
  %p460 = pneg %p459
  %462 = shalt.err (%p460)
  %s463 = scalar_lea.sflag [#allocation3], 8
  %464 = vsyncmov %s463
  %s465 = vpop.sfrf %464
  %p466 = scmp.eq.s32.totalorder %s465, 0
  %p467 = pneg %p466
  %469 = shalt.err (%p467)
  %s470 = scalar_lea.sflag [#allocation3], 9
  %471 = vsyncmov %s470
  %s472 = vpop.sfrf %471
  %p473 = scmp.eq.s32.totalorder %s472, 0
  %p474 = pneg %p473
  %476 = shalt.err (%p474)
  %s477 = scalar_lea.sflag [#allocation3], 10
  %478 = vsyncmov %s477
  %s479 = vpop.sfrf %478
  %p480 = scmp.eq.s32.totalorder %s479, 0
  %p481 = pneg %p480
  %483 = shalt.err (%p481)
  %s484 = scalar_lea.sflag [#allocation3], 11
  %485 = vsyncmov %s484
  %s486 = vpop.sfrf %485
  %p487 = scmp.eq.s32.totalorder %s486, 0
  %p488 = pneg %p487
  %490 = shalt.err (%p488)
  %s491 = scalar_lea.sflag [#allocation3], 12
  %492 = vsyncmov %s491
  %s493 = vpop.sfrf %492
  %p494 = scmp.eq.s32.totalorder %s493, 0
  %p495 = pneg %p494
  %497 = shalt.err (%p495)
  %s498 = scalar_lea.sflag [#allocation3], 13
  %499 = vsyncmov %s498
  %s500 = vpop.sfrf %499
  %p501 = scmp.eq.s32.totalorder %s500, 0
  %p502 = pneg %p501
  %504 = shalt.err (%p502)
  %s505 = scalar_lea.sflag [#allocation3], 14
  %506 = vsyncmov %s505
  %s507 = vpop.sfrf %506
  %p508 = scmp.eq.s32.totalorder %s507, 0
  %p509 = pneg %p508
  %511 = shalt.err (%p509)
  %s512 = scalar_lea.sflag [#allocation3], 15
  %513 = vsyncmov %s512
  %s514 = vpop.sfrf %513
  %p515 = scmp.eq.s32.totalorder %s514, 0
  %p516 = pneg %p515
  %518 = shalt.err (%p516)

</llo_original>
